<compile_context>
chip_gen: v7x
topology: tpu7x:2x2x1
jax: 0.10.0
libtpu: 0.0.40
codegen_flags: <defaults>
</compile_context>

<pallas_src>
import functools
import math

import numpy as np
import jax
import jax.numpy as jnp
from jax.experimental import pallas as pl
from jax.experimental.pallas import tpu as pltpu


# ---------------------------------------------------------------------------
# CycleFC.gen_offset(): per-channel integer shift + which spatial axis
# ---------------------------------------------------------------------------
def _gen_shifts(in_channels, kernel_size):
    kh, kw = kernel_size
    assert kh == 1 or kw == 1, kernel_size
    start = kh * kw // 2
    shifts = []
    for i in range(in_channels):
        if kh == 1:
            shifts.append((i + start) % kw - kw // 2)   # shift along W
        else:
            shifts.append((i + start) % kh - kh // 2)   # shift along H
    return shifts, (kh == 1)


# ---------------------------------------------------------------------------
# Kernel bodies.  x block is (1, C, TM) cut straight out of NCHW-flat x.
# ---------------------------------------------------------------------------
def _cyclefc_kernel_grouped(x_ref, w_ref, valid_ref, b_ref, o_ref, *, roll_shifts):
    """v6e/v7x path: acc += W_d @ (roll_d(x) * valid_d) per distinct shift."""
    x2 = x_ref[0]                                   # (C, TM), native dtype
    acc = None
    for i, s in enumerate(roll_shifts):             # static unroll, D ~ 7 terms
        shifted = x2 if s == 0 else pltpu.roll(x2, shift=s, axis=1)   # XLU
        masked = shifted * valid_ref[i]             # (C,TM) * (1,TM) boundary
        part = jnp.dot(w_ref[i], masked,            # (O,C)@(C,TM) on the MXU
                       preferred_element_type=jnp.float32)
        acc = part if acc is None else acc + part
    acc = acc + b_ref[...]                          # (O,TM) + (O,1), f32
    o_ref[0] = acc.astype(o_ref.dtype)              # NCHW block, no transpose


def _cyclefc_kernel_fused(x_ref, w_ref, valid_ref, chan_ref, b_ref, o_ref, *,
                          roll_shifts):
    """v5e path: build xs = sum_d roll_d(x)*mask_d, then one fused matmul."""
    x2 = x_ref[0]                                   # (C, TM)
    xs = None
    for i, s in enumerate(roll_shifts):
        shifted = x2 if s == 0 else pltpu.roll(x2, shift=s, axis=1)
        term = shifted * valid_ref[i] * chan_ref[i]  # (C,TM)*(1,TM)*(C,1)
        xs = term if xs is None else xs + term
    # TODO(synk): for bf16 activations on v5e (no bf16 VALU) accumulate xs in f32.
    acc = jnp.dot(w_ref[...], xs, preferred_element_type=jnp.float32) + b_ref[...]
    o_ref[0] = acc.astype(o_ref.dtype)


# ---------------------------------------------------------------------------
# Generation-aware sizing helpers.
# ---------------------------------------------------------------------------
def _tpu_vmem_limit_bytes():
    try:
        cap = int(pltpu.get_tpu_info().vmem_capacity_bytes)
    except Exception:
        cap = 64 * 1024 * 1024                      # conservative (v7x per-TC)
    return (cap * 3) // 4                           # ~96 MiB v5e/v6e, ~48 MiB v7x


def _default_mode():
    try:
        kind = jax.devices()[0].device_kind.lower()
    except Exception:
        kind = ""
    # v5e: keep the single fused matmul (197 TF/s MXU); v6e/v7x: per-group
    # matmuls overlap the MXU with the XLU roll chain.
    if "v5 lite" in kind or "v5lite" in kind or "v5e" in kind:
        return "fused"
    return "grouped"


def _estimate_vmem_bytes(tm, C, O, D, itemsize, fused):
    """Honest per-step accounting: double-buffered in/out, f32 acc, roll temps,
    resident weights/masks/bias."""
    x_blk = C * tm * itemsize
    o_blk = O * tm * itemsize
    acc = O * tm * 4
    temps = (3 if fused else 2) * C * tm * itemsize
    resident = D * O * C * itemsize + D * tm * itemsize + O * 4 + D * C * 4
    return 2 * x_blk + 2 * o_blk + acc + temps + resident


def _pick_spatial_tile(M, quantum, C, O, D, itemsize, fused, vmem_limit):
    """Largest tile of the flat spatial axis: whole image unless it would blow
    VMEM; any smaller tile must divide M and be a multiple of both `quantum`
    (halo-free rolls) and 128 (lane-aligned rolls / unmasked stores)."""
    budget = int(vmem_limit * 0.8)
    if _estimate_vmem_bytes(M, C, O, D, itemsize, fused) <= budget:
        return M
    step = quantum * 128 // math.gcd(quantum, 128)  # lcm(quantum, 128)
    for q in range(M // step, 0, -1):
        tm = q * step
        if M % tm == 0 and _estimate_vmem_bytes(tm, C, O, D, itemsize, fused) <= budget:
            return tm
    return M                                        # pathological: whole image


# ---------------------------------------------------------------------------
# Wrapper (NCHW in / NCHW out, matching the PyTorch module).
# ---------------------------------------------------------------------------
def cycle_fc_forward(x_nchw, weight_oc11, bias_o, kernel_size, *, groups=1,
                     mode=None):
    """x_nchw: (B, C, H, W); weight_oc11: (O, C, 1, 1); bias_o: (O,)."""
    B, C, H, W = x_nchw.shape
    O = weight_oc11.shape[0]
    # TODO(synk): groups > 1 (weight (O, C//groups, 1, 1)) not implemented.
    assert groups == 1 and weight_oc11.shape[1] == C, "only groups == 1 supported"
    if mode is None:
        mode = _default_mode()
    fused = (mode == "fused")

    per_chan, shift_along_w = _gen_shifts(C, kernel_size)
    uniq = sorted(set(per_chan))
    D = len(uniq)
    dtype = x_nchw.dtype
    itemsize = np.dtype(dtype).itemsize
    M = H * W

    # Free contiguous reshape; the kernel reads/writes NCHW blocks directly.
    x_flat = x_nchw.reshape(B, C, M)

    # Shift expressed on the flattened spatial axis:
    #   (1,K): shift by d inside each W-row  -> flat shift d,   quantum = W
    #   (K,1): shift by d rows               -> flat shift d*W, quantum = M (halo)
    quantum = W if shift_along_w else M

    vmem_limit = _tpu_vmem_limit_bytes()
    TM = _pick_spatial_tile(M, quantum, C, O, D, itemsize, fused, vmem_limit)
    grid = (B, M // TM)

    # Boundary-validity masks (D, 1, TM): 1 where the shifted source position
    # stays inside the image (zero padding), 0 otherwise.  Because TM is a
    # multiple of `quantum`, the pattern is identical for every block and every
    # roll-wrapped position is masked to zero -> roll+mask is exact.
    m_idx = np.arange(TM)
    valid_np = np.zeros((D, 1, TM), np.float32)
    for di, d in enumerate(uniq):
        if shift_along_w:
            w_pos = m_idx % W
            valid_np[di, 0] = (w_pos + d >= 0) & (w_pos + d < W)
        else:
            h_pos = m_idx // W                       # TM == M in this branch
            valid_np[di, 0] = (h_pos + d >= 0) & (h_pos + d < H)
    valid = jnp.asarray(valid_np, dtype=dtype)

    roll_shifts = tuple(int((-(d if shift_along_w else d * W)) % TM) for d in uniq)

    w_oc = weight_oc11[:, :, 0, 0].astype(dtype)     # (O, C)
    b_f32 = bias_o.astype(jnp.float32).reshape(O, 1)

    out_shape = jax.ShapeDtypeStruct((B, O, M), dtype)
    # TODO(synk): if xprof shows exposed DMA on x, add pipeline_mode=pl.Buffered(3).
    x_spec = pl.BlockSpec((1, C, TM), lambda b, t: (b, 0, t))
    out_spec = pl.BlockSpec((1, O, TM), lambda b, t: (b, 0, t))
    valid_spec = pl.BlockSpec((D, 1, TM), lambda b, t: (0, 0, 0))
    bias_spec = pl.BlockSpec((O, 1), lambda b, t: (0, 0))
    cparams = pltpu.CompilerParams(
        dimension_semantics=("parallel", "parallel"),
        vmem_limit_bytes=vmem_limit)

    if fused:
        # Channel-membership masks for the single fused matmul.
        chan_np = np.zeros((D, C, 1), np.float32)
        for di, d in enumerate(uniq):
            chan_np[di, :, 0] = [1.0 if per_chan[c] == d else 0.0 for c in range(C)]
        chan = jnp.asarray(chan_np, dtype=dtype)
        kernel = functools.partial(_cyclefc_kernel_fused, roll_shifts=roll_shifts)
        out_flat = pl.pallas_call(
            kernel, out_shape=out_shape, grid=grid,
            in_specs=[x_spec,
                      pl.BlockSpec((O, C), lambda b, t: (0, 0)),
                      valid_spec,
                      pl.BlockSpec((D, C, 1), lambda b, t: (0, 0, 0)),
                      bias_spec],
            out_specs=out_spec,
            compiler_params=cparams,
        )(x_flat, w_oc, valid, chan, b_f32)
    else:
        # Channel membership folded into per-group weights at trace time; only
        # the boundary mask stays in-kernel.
        chan_sel_np = np.zeros((D, 1, C), np.float32)
        for di, d in enumerate(uniq):
            chan_sel_np[di, 0] = [1.0 if per_chan[c] == d else 0.0 for c in range(C)]
        w_groups = (jnp.asarray(chan_sel_np)
                    * w_oc.astype(jnp.float32)[None]).astype(dtype)   # (D, O, C)
        kernel = functools.partial(_cyclefc_kernel_grouped, roll_shifts=roll_shifts)
        out_flat = pl.pallas_call(
            kernel, out_shape=out_shape, grid=grid,
            in_specs=[x_spec,
                      pl.BlockSpec((D, O, C), lambda b, t: (0, 0, 0)),
                      valid_spec,
                      bias_spec],
            out_specs=out_spec,
            compiler_params=cparams,
        )(x_flat, w_groups, valid, b_f32)

    return out_flat.reshape(B, O, H, W)              # free contiguous reshape


# ---------------------------------------------------------------------------
# Pure-JAX reference (integer-offset deform_conv2d with a 1x1 kernel).
# ---------------------------------------------------------------------------
def cycle_fc_reference(x_nchw, weight_oc11, bias_o, kernel_size):
    B, C, H, W = x_nchw.shape
    per_chan, axis_is_w = _gen_shifts(C, kernel_size)
    chans = []
    for c in range(C):
        d = per_chan[c]
        xc = x_nchw[:, c]                            # (B, H, W)
        s = jnp.zeros_like(xc)
        if axis_is_w:
            if d == 0:
                s = xc
            elif d > 0:
                s = s.at[:, :, :W - d].set(xc[:, :, d:])
            else:
                s = s.at[:, :, -d:].set(xc[:, :, :W + d])
        else:
            if d == 0:
                s = xc
            elif d > 0:
                s = s.at[:, :H - d, :].set(xc[:, d:, :])
            else:
                s = s.at[:, -d:, :].set(xc[:, :H + d, :])
        chans.append(s)
    xs = jnp.stack(chans, axis=1)                    # (B, C, H, W)
    w = weight_oc11[:, :, 0, 0]                      # (O, C)
    return jnp.einsum('oc,bchw->bohw', w, xs) + bias_o[None, :, None, None]


if __name__ == "__main__":
    # Small deterministic config: CycleFC(16, 32, ...) on 16x16 images.
    B, C, O, H, W = 2, 16, 32, 16, 16
    key = jax.random.PRNGKey(0)
    kx, kw_, kb = jax.random.split(key, 3)

    # kaiming_uniform_(a=sqrt(5)) on (O, C, 1, 1): bound = 1/sqrt(fan_in), fan_in = C
    bound = 1.0 / math.sqrt(C)
    x = jax.random.normal(kx, (B, C, H, W), jnp.float32)
    weight = jax.random.uniform(kw_, (O, C, 1, 1), jnp.float32, -bound, bound)
    bias = jax.random.uniform(kb, (O,), jnp.float32, -bound, bound)

    for kernel_size in [(1, 7), (7, 1)]:
        ref = cycle_fc_reference(x, weight, bias, kernel_size)
        for mode in ("grouped", "fused"):            # exercise both chip paths
            out = cycle_fc_forward(x, weight, bias, kernel_size, mode=mode)
            out = jax.block_until_ready(out)
            assert out.shape == (B, O, H, W)
            np.testing.assert_allclose(np.asarray(out), np.asarray(ref),
                                       rtol=2e-5, atol=2e-5)
        # auto mode resolves to one of the two paths above based on device_kind
        out = jax.block_until_ready(cycle_fc_forward(x, weight, bias, kernel_size))
        np.testing.assert_allclose(np.asarray(out), np.asarray(ref),
                                   rtol=2e-5, atol=2e-5)
    print("KERNEL_OK")
</pallas_src>

<mosaic_0001>
module attributes {stable_mosaic.version = 11 : i64} {
  func.func @_cyclefc_kernel_grouped(%arg0: i32, %arg1: i32, %arg2: memref<1x16x256xf32, #tpu.memory_space<vmem>>, %arg3: memref<7x32x16xf32, #tpu.memory_space<vmem>>, %arg4: memref<7x1x256xf32, #tpu.memory_space<vmem>>, %arg5: memref<32x1xf32, #tpu.memory_space<vmem>>, %arg6: memref<1x32x256xf32, #tpu.memory_space<vmem>>) attributes {dimension_semantics = [#tpu.dimension_semantics<parallel>, #tpu.dimension_semantics<parallel>], iteration_bounds = array<i64: 2, 1>, scalar_prefetch = 0 : i64, scratch_operands = 0 : i64, tpu.core_type = #tpu.core_type<tc>, window_params = [{transform_indices = @transform_0, window_bounds = array<i64: 1, 16, 256>}, {pipeline_mode = #tpu.pipeline_mode<synchronous>, transform_indices = @transform_1, window_bounds = array<i64: 7, 32, 16>}, {pipeline_mode = #tpu.pipeline_mode<synchronous>, transform_indices = @transform_2, window_bounds = array<i64: 7, 1, 256>}, {pipeline_mode = #tpu.pipeline_mode<synchronous>, transform_indices = @transform_3, window_bounds = array<i64: 32, 1>}, {transform_indices = @transform_4, window_bounds = array<i64: 1, 32, 256>}]} {
    %c0 = arith.constant 0 : index
    %c0_0 = arith.constant 0 : index
    %c0_1 = arith.constant 0 : index
    %0 = vector.load %arg2[%c0, %c0_0, %c0_1] : memref<1x16x256xf32, #tpu.memory_space<vmem>>, vector<1x16x256xf32>
    %1 = vector.shape_cast %0 : vector<1x16x256xf32> to vector<16x256xf32>
    %c3_i32 = arith.constant 3 : i32
    %2 = tpu.dynamic_rotate %1 by %c3_i32 dim 1 : vector<16x256xf32>, i32 -> vector<16x256xf32>
    %c0_2 = arith.constant 0 : index
    %c0_3 = arith.constant 0 : index
    %c0_4 = arith.constant 0 : index
    %3 = vector.load %arg4[%c0_2, %c0_3, %c0_4] : memref<7x1x256xf32, #tpu.memory_space<vmem>>, vector<1x1x256xf32>
    %4 = vector.shape_cast %3 : vector<1x1x256xf32> to vector<1x256xf32>
    %5 = vector.broadcast %4 : vector<1x256xf32> to vector<16x256xf32>
    %6 = arith.mulf %2, %5 : vector<16x256xf32>
    %c0_5 = arith.constant 0 : index
    %c0_6 = arith.constant 0 : index
    %c0_7 = arith.constant 0 : index
    %7 = vector.load %arg3[%c0_5, %c0_6, %c0_7] : memref<7x32x16xf32, #tpu.memory_space<vmem>>, vector<1x32x16xf32>
    %8 = vector.shape_cast %7 : vector<1x32x16xf32> to vector<32x16xf32>
    %cst = arith.constant dense<0.000000e+00> : vector<32x256xf32>
    %9 = tpu.matmul %8, %6, %cst {dimension_numbers = #tpu.dot_dimension_numbers<[1], [0], [0], [1], [0, 0, 1, 1], [], []>} : vector<32x16xf32>, vector<16x256xf32>, vector<32x256xf32> -> vector<32x256xf32>
    %c2_i32 = arith.constant 2 : i32
    %10 = tpu.dynamic_rotate %1 by %c2_i32 dim 1 : vector<16x256xf32>, i32 -> vector<16x256xf32>
    %c1 = arith.constant 1 : index
    %c0_8 = arith.constant 0 : index
    %c0_9 = arith.constant 0 : index
    %11 = vector.load %arg4[%c1, %c0_8, %c0_9] : memref<7x1x256xf32, #tpu.memory_space<vmem>>, vector<1x1x256xf32>
    %12 = vector.shape_cast %11 : vector<1x1x256xf32> to vector<1x256xf32>
    %13 = vector.broadcast %12 : vector<1x256xf32> to vector<16x256xf32>
    %14 = arith.mulf %10, %13 : vector<16x256xf32>
    %c1_10 = arith.constant 1 : index
    %c0_11 = arith.constant 0 : index
    %c0_12 = arith.constant 0 : index
    %15 = vector.load %arg3[%c1_10, %c0_11, %c0_12] : memref<7x32x16xf32, #tpu.memory_space<vmem>>, vector<1x32x16xf32>
    %16 = vector.shape_cast %15 : vector<1x32x16xf32> to vector<32x16xf32>
    %cst_13 = arith.constant dense<0.000000e+00> : vector<32x256xf32>
    %17 = tpu.matmul %16, %14, %cst_13 {dimension_numbers = #tpu.dot_dimension_numbers<[1], [0], [0], [1], [0, 0, 1, 1], [], []>} : vector<32x16xf32>, vector<16x256xf32>, vector<32x256xf32> -> vector<32x256xf32>
    %18 = arith.addf %9, %17 : vector<32x256xf32>
    %c1_i32 = arith.constant 1 : i32
    %19 = tpu.dynamic_rotate %1 by %c1_i32 dim 1 : vector<16x256xf32>, i32 -> vector<16x256xf32>
    %c2 = arith.constant 2 : index
    %c0_14 = arith.constant 0 : index
    %c0_15 = arith.constant 0 : index
    %20 = vector.load %arg4[%c2, %c0_14, %c0_15] : memref<7x1x256xf32, #tpu.memory_space<vmem>>, vector<1x1x256xf32>
    %21 = vector.shape_cast %20 : vector<1x1x256xf32> to vector<1x256xf32>
    %22 = vector.broadcast %21 : vector<1x256xf32> to vector<16x256xf32>
    %23 = arith.mulf %19, %22 : vector<16x256xf32>
    %c2_16 = arith.constant 2 : index
    %c0_17 = arith.constant 0 : index
    %c0_18 = arith.constant 0 : index
    %24 = vector.load %arg3[%c2_16, %c0_17, %c0_18] : memref<7x32x16xf32, #tpu.memory_space<vmem>>, vector<1x32x16xf32>
    %25 = vector.shape_cast %24 : vector<1x32x16xf32> to vector<32x16xf32>
    %cst_19 = arith.constant dense<0.000000e+00> : vector<32x256xf32>
    %26 = tpu.matmul %25, %23, %cst_19 {dimension_numbers = #tpu.dot_dimension_numbers<[1], [0], [0], [1], [0, 0, 1, 1], [], []>} : vector<32x16xf32>, vector<16x256xf32>, vector<32x256xf32> -> vector<32x256xf32>
    %27 = arith.addf %18, %26 : vector<32x256xf32>
    %c3 = arith.constant 3 : index
    %c0_20 = arith.constant 0 : index
    %c0_21 = arith.constant 0 : index
    %28 = vector.load %arg4[%c3, %c0_20, %c0_21] : memref<7x1x256xf32, #tpu.memory_space<vmem>>, vector<1x1x256xf32>
    %29 = vector.shape_cast %28 : vector<1x1x256xf32> to vector<1x256xf32>
    %30 = vector.broadcast %29 : vector<1x256xf32> to vector<16x256xf32>
    %31 = arith.mulf %1, %30 : vector<16x256xf32>
    %c3_22 = arith.constant 3 : index
    %c0_23 = arith.constant 0 : index
    %c0_24 = arith.constant 0 : index
    %32 = vector.load %arg3[%c3_22, %c0_23, %c0_24] : memref<7x32x16xf32, #tpu.memory_space<vmem>>, vector<1x32x16xf32>
    %33 = vector.shape_cast %32 : vector<1x32x16xf32> to vector<32x16xf32>
    %cst_25 = arith.constant dense<0.000000e+00> : vector<32x256xf32>
    %34 = tpu.matmul %33, %31, %cst_25 {dimension_numbers = #tpu.dot_dimension_numbers<[1], [0], [0], [1], [0, 0, 1, 1], [], []>} : vector<32x16xf32>, vector<16x256xf32>, vector<32x256xf32> -> vector<32x256xf32>
    %35 = arith.addf %27, %34 : vector<32x256xf32>
    %c255_i32 = arith.constant 255 : i32
    %36 = tpu.dynamic_rotate %1 by %c255_i32 dim 1 : vector<16x256xf32>, i32 -> vector<16x256xf32>
    %c4 = arith.constant 4 : index
    %c0_26 = arith.constant 0 : index
    %c0_27 = arith.constant 0 : index
    %37 = vector.load %arg4[%c4, %c0_26, %c0_27] : memref<7x1x256xf32, #tpu.memory_space<vmem>>, vector<1x1x256xf32>
    %38 = vector.shape_cast %37 : vector<1x1x256xf32> to vector<1x256xf32>
    %39 = vector.broadcast %38 : vector<1x256xf32> to vector<16x256xf32>
    %40 = arith.mulf %36, %39 : vector<16x256xf32>
    %c4_28 = arith.constant 4 : index
    %c0_29 = arith.constant 0 : index
    %c0_30 = arith.constant 0 : index
    %41 = vector.load %arg3[%c4_28, %c0_29, %c0_30] : memref<7x32x16xf32, #tpu.memory_space<vmem>>, vector<1x32x16xf32>
    %42 = vector.shape_cast %41 : vector<1x32x16xf32> to vector<32x16xf32>
    %cst_31 = arith.constant dense<0.000000e+00> : vector<32x256xf32>
    %43 = tpu.matmul %42, %40, %cst_31 {dimension_numbers = #tpu.dot_dimension_numbers<[1], [0], [0], [1], [0, 0, 1, 1], [], []>} : vector<32x16xf32>, vector<16x256xf32>, vector<32x256xf32> -> vector<32x256xf32>
    %44 = arith.addf %35, %43 : vector<32x256xf32>
    %c254_i32 = arith.constant 254 : i32
    %45 = tpu.dynamic_rotate %1 by %c254_i32 dim 1 : vector<16x256xf32>, i32 -> vector<16x256xf32>
    %c5 = arith.constant 5 : index
    %c0_32 = arith.constant 0 : index
    %c0_33 = arith.constant 0 : index
    %46 = vector.load %arg4[%c5, %c0_32, %c0_33] : memref<7x1x256xf32, #tpu.memory_space<vmem>>, vector<1x1x256xf32>
    %47 = vector.shape_cast %46 : vector<1x1x256xf32> to vector<1x256xf32>
    %48 = vector.broadcast %47 : vector<1x256xf32> to vector<16x256xf32>
    %49 = arith.mulf %45, %48 : vector<16x256xf32>
    %c5_34 = arith.constant 5 : index
    %c0_35 = arith.constant 0 : index
    %c0_36 = arith.constant 0 : index
    %50 = vector.load %arg3[%c5_34, %c0_35, %c0_36] : memref<7x32x16xf32, #tpu.memory_space<vmem>>, vector<1x32x16xf32>
    %51 = vector.shape_cast %50 : vector<1x32x16xf32> to vector<32x16xf32>
    %cst_37 = arith.constant dense<0.000000e+00> : vector<32x256xf32>
    %52 = tpu.matmul %51, %49, %cst_37 {dimension_numbers = #tpu.dot_dimension_numbers<[1], [0], [0], [1], [0, 0, 1, 1], [], []>} : vector<32x16xf32>, vector<16x256xf32>, vector<32x256xf32> -> vector<32x256xf32>
    %53 = arith.addf %44, %52 : vector<32x256xf32>
    %c253_i32 = arith.constant 253 : i32
    %54 = tpu.dynamic_rotate %1 by %c253_i32 dim 1 : vector<16x256xf32>, i32 -> vector<16x256xf32>
    %c6 = arith.constant 6 : index
    %c0_38 = arith.constant 0 : index
    %c0_39 = arith.constant 0 : index
    %55 = vector.load %arg4[%c6, %c0_38, %c0_39] : memref<7x1x256xf32, #tpu.memory_space<vmem>>, vector<1x1x256xf32>
    %56 = vector.shape_cast %55 : vector<1x1x256xf32> to vector<1x256xf32>
    %57 = vector.broadcast %56 : vector<1x256xf32> to vector<16x256xf32>
    %58 = arith.mulf %54, %57 : vector<16x256xf32>
    %c6_40 = arith.constant 6 : index
    %c0_41 = arith.constant 0 : index
    %c0_42 = arith.constant 0 : index
    %59 = vector.load %arg3[%c6_40, %c0_41, %c0_42] : memref<7x32x16xf32, #tpu.memory_space<vmem>>, vector<1x32x16xf32>
    %60 = vector.shape_cast %59 : vector<1x32x16xf32> to vector<32x16xf32>
    %cst_43 = arith.constant dense<0.000000e+00> : vector<32x256xf32>
    %61 = tpu.matmul %60, %58, %cst_43 {dimension_numbers = #tpu.dot_dimension_numbers<[1], [0], [0], [1], [0, 0, 1, 1], [], []>} : vector<32x16xf32>, vector<16x256xf32>, vector<32x256xf32> -> vector<32x256xf32>
    %62 = arith.addf %53, %61 : vector<32x256xf32>
    %c0_44 = arith.constant 0 : index
    %c0_45 = arith.constant 0 : index
    %63 = vector.load %arg5[%c0_44, %c0_45] : memref<32x1xf32, #tpu.memory_space<vmem>>, vector<32x1xf32>
    %64 = vector.broadcast %63 : vector<32x1xf32> to vector<32x256xf32>
    %65 = arith.addf %62, %64 : vector<32x256xf32>
    %c0_46 = arith.constant 0 : index
    %c0_47 = arith.constant 0 : index
    %c0_48 = arith.constant 0 : index
    %66 = vector.load %arg6[%c0_46, %c0_47, %c0_48] : memref<1x32x256xf32, #tpu.memory_space<vmem>>, vector<1x32x256xf32>
    %67 = vector.shape_cast %66 : vector<1x32x256xf32> to vector<32x256xf32>
    %68 = vector.shape_cast %65 : vector<32x256xf32> to vector<1x32x256xf32>
    tpu.vector_store %arg6[%c0_46, %c0_47, %c0_48], %68 {strides = array<i32>} : memref<1x32x256xf32, #tpu.memory_space<vmem>>, vector<1x32x256xf32>,
    return
  }
  func.func @transform_0(%arg0: i32, %arg1: i32) -> (i32, i32, i32) {
    %c0_i32 = arith.constant 0 : i32
    %c0_i32_0 = arith.constant 0 : i32
    return %arg0, %c0_i32, %arg1 : i32, i32, i32
  }
  func.func @transform_1(%arg0: i32, %arg1: i32) -> (i32, i32, i32) {
    %c0_i32 = arith.constant 0 : i32
    %c0_i32_0 = arith.constant 0 : i32
    %c0_i32_1 = arith.constant 0 : i32
    %c0_i32_2 = arith.constant 0 : i32
    return %c0_i32, %c0_i32_0, %c0_i32_1 : i32, i32, i32
  }
  func.func @transform_2(%arg0: i32, %arg1: i32) -> (i32, i32, i32) {
    %c0_i32 = arith.constant 0 : i32
    %c0_i32_0 = arith.constant 0 : i32
    %c0_i32_1 = arith.constant 0 : i32
    %c0_i32_2 = arith.constant 0 : i32
    return %c0_i32, %c0_i32_0, %c0_i32_1 : i32, i32, i32
  }
  func.func @transform_3(%arg0: i32, %arg1: i32) -> (i32, i32) {
    %c0_i32 = arith.constant 0 : i32
    %c0_i32_0 = arith.constant 0 : i32
    %c0_i32_1 = arith.constant 0 : i32
    return %c0_i32, %c0_i32_0 : i32, i32
  }
  func.func @transform_4(%arg0: i32, %arg1: i32) -> (i32, i32, i32) {
    %c0_i32 = arith.constant 0 : i32
    %c0_i32_0 = arith.constant 0 : i32
    return %arg0, %c0_i32, %arg1 : i32, i32, i32
  }
}

</mosaic_0001>

<llo_original>
// kernel: tpu_custom_call.1
$region0: #{tpu_custom_call.1}
  #allocation0 [shape = 'u32[]', space=smem, size = 0x4, offset = 0x4, fixed_abs, tag = 'smem constant byte address 0x4 - core index']
  #allocation1 [shape = 'u32[144,128]{1,0:T(1,128)}', space=vmem, size = 0x12000, scoped, tag = 'internal scratch']
  %s0 = inlined_call_operand.vmem [shape: f32[2,16,256], index: 0, kind: input, shape index: {}]
  %s1 = inlined_call_operand.vmem [shape: f32[7,32,16], index: 1, kind: input, shape index: {}]
  %s2 = inlined_call_operand.vmem [shape: f32[7,1,256], index: 2, kind: input, shape index: {}]
  %s3 = inlined_call_operand.vmem [shape: f32[32,1], index: 3, kind: input, shape index: {}]
  %s4 = inlined_call_operand.hbm [shape: f32[2,32,256], index: 4, kind: output, shape index: {}]
  %s5 = sld [smem:[#allocation0]]
  $region49: #{tpu_custom_call.1} parent=0
    _
  %s7 = ssub.s32 1, %s5
  %s8 = scalar_select 0, %s7, %s5
  $region1: #{tpu_custom_call.1} parent=0
    #allocation2 [shape = 'u8[65536]{0}', space=vmem, size = 0x10000, scoped, tag = 'output window, operand 0']
    #allocation3 [shape = 's32[2]{0}', space=sflag, size = 0x8, scoped, tag = 'scoped memory for tpu_custom_call.1']
    %9 = vsyncpa [#allocation3], 0
    %s10 = scalar_lea.sflag [#allocation3], 1
    %11 = vsyncpa %s10, 0
    loop: start=0, step=1, limit=4
    $region2: #{tpu_custom_call.1} parent=1 // loop_pre_header
      _
    $region3: #{tpu_custom_call.1} parent=1 // loop_header
      %s13 = sphi 0, %s17
      %p14 = scmp.ge.s32.totalorder %s13, 4
      %s20 = sphi 0, %s32
      %s21 = sphi 0, %s28
      %s22 = sphi 0, %s20
      %s23 = sphi 0, %s21
      %s24 = sphi 0, %s22
      %s25 = sphi 0, %s23
      %s37 = sphi 0, %s39
      %s40 = sphi 0, %s37
      %s41 = sphi 0, %s40
      %s57 = sphi 0, %s41
      %s61 = sphi 0, %s61
      %s63 = sphi 0, %s61
      %s64 = sphi 0, %s63
      %s78 = sphi 0, %s64
      %s82 = sphi 0, %s82
      %s84 = sphi 0, %s82
      %s85 = sphi 0, %s84
      %s99 = sphi 0, %s85
      %s103 = sphi 0, %s103
      %s105 = sphi 0, %s103
      %s106 = sphi 0, %s105
      %s120 = sphi 0, %s106
      %s128 = sphi 0, %s130
      %s131 = sphi 0, %s128
      %s132 = sphi 0, %s131
      %s148 = sphi 0, %s132
    $region4: #{tpu_custom_call.1} parent=1 // loop_header_branch
      %16 = sbr.rel (%p14) target = $region8
    $region5: #{tpu_custom_call.1} parent=1 // loop_body
      %s18 = ssub.s32 %s13, 1
      %s19 = ssub.s32 %s13, 2
      %s26 = sadd.s32 1, %s21
      %p27 = scmp.ge.s32.totalorder %s26, 1
      %s28 = scalar_select %p27, 0, %s26
      %s29 = sadd.s32 1, %s20
      %s30 = scalar_select %p27, %s29, %s20
      %p31 = scmp.ge.s32.totalorder %s30, 2
      %s32 = scalar_select %p31, 0, %s30
      %s33 = ssub.s32 %s20, %s32
      %s34 = ssub.s32 %s21, %s28
      %s35 = sor.u32 %s33, %s34
      %p36 = scmp.eq.s32.totalorder %s35, 0
      %s38 = sadd.s32 %s37, 1
      %s39 = scalar_select %p36, %s37, %s38
      %p42 = pneg %p36
      %p43 = scmp.eq.s32.totalorder %s13, 1
      %p44 = por %p42, %p43
      %p45 = scmp.ne.s32.totalorder %s37, %s40
      %p46 = scmp.eq.s32.totalorder %s13, 0
      %p47 = por %p45, %p46
      %p48 = scmp.ne.s32.totalorder %s37, %s40
      %p49 = scmp.eq.s32.totalorder %s18, 1
      %p50 = por %p48, %p49
      %p51 = scmp.ne.s32.totalorder %s40, %s41
      %p52 = scmp.eq.s32.totalorder %s18, 0
      %p53 = por %p51, %p52
      %p54 = scmp.ne.s32.totalorder %s40, %s41
      %p55 = scmp.eq.s32.totalorder %s19, 1
      %p56 = por %p54, %p55
      %p58 = scmp.ne.s32.totalorder %s41, %s57
      %p59 = scmp.eq.s32.totalorder %s19, 0
      %p60 = por %p58, %p59
      %s62 = sadd.s32 %s61, 1
      %p65 = scmp.eq.s32.totalorder %s13, 1
      %p66 = scmp.ne.s32.totalorder %s61, %s63
      %p67 = scmp.eq.s32.totalorder %s13, 0
      %p68 = por %p66, %p67
      %p69 = scmp.ne.s32.totalorder %s61, %s63
      %p70 = scmp.eq.s32.totalorder %s18, 1
      %p71 = por %p69, %p70
      %p72 = scmp.ne.s32.totalorder %s63, %s64
      %p73 = scmp.eq.s32.totalorder %s18, 0
      %p74 = por %p72, %p73
      %p75 = scmp.ne.s32.totalorder %s63, %s64
      %p76 = scmp.eq.s32.totalorder %s19, 1
      %p77 = por %p75, %p76
      %p79 = scmp.ne.s32.totalorder %s64, %s78
      %p80 = scmp.eq.s32.totalorder %s19, 0
      %p81 = por %p79, %p80
      %s83 = sadd.s32 %s82, 1
      %p86 = scmp.eq.s32.totalorder %s13, 1
      %p87 = scmp.ne.s32.totalorder %s82, %s84
      %p88 = scmp.eq.s32.totalorder %s13, 0
      %p89 = por %p87, %p88
      %p90 = scmp.ne.s32.totalorder %s82, %s84
      %p91 = scmp.eq.s32.totalorder %s18, 1
      %p92 = por %p90, %p91
      %p93 = scmp.ne.s32.totalorder %s84, %s85
      %p94 = scmp.eq.s32.totalorder %s18, 0
      %p95 = por %p93, %p94
      %p96 = scmp.ne.s32.totalorder %s84, %s85
      %p97 = scmp.eq.s32.totalorder %s19, 1
      %p98 = por %p96, %p97
      %p100 = scmp.ne.s32.totalorder %s85, %s99
      %p101 = scmp.eq.s32.totalorder %s19, 0
      %p102 = por %p100, %p101
      %s104 = sadd.s32 %s103, 1
      %p107 = scmp.eq.s32.totalorder %s13, 1
      %p108 = scmp.ne.s32.totalorder %s103, %s105
      %p109 = scmp.eq.s32.totalorder %s13, 0
      %p110 = por %p108, %p109
      %p111 = scmp.ne.s32.totalorder %s103, %s105
      %p112 = scmp.eq.s32.totalorder %s18, 1
      %p113 = por %p111, %p112
      %p114 = scmp.ne.s32.totalorder %s105, %s106
      %p115 = scmp.eq.s32.totalorder %s18, 0
      %p116 = por %p114, %p115
      %p117 = scmp.ne.s32.totalorder %s105, %s106
      %p118 = scmp.eq.s32.totalorder %s19, 1
      %p119 = por %p117, %p118
      %p121 = scmp.ne.s32.totalorder %s106, %s120
      %p122 = scmp.eq.s32.totalorder %s19, 0
      %p123 = por %p121, %p122
      %s124 = ssub.s32 %s20, %s32
      %s125 = ssub.s32 %s21, %s28
      %s126 = sor.u32 %s124, %s125
      %p127 = scmp.eq.s32.totalorder %s126, 0
      %s129 = sadd.s32 %s128, 1
      %s130 = scalar_select %p127, %s128, %s129
      %p133 = pneg %p127
      %p134 = scmp.eq.s32.totalorder %s13, 1
      %p135 = por %p133, %p134
      %p136 = scmp.ne.s32.totalorder %s128, %s131
      %p137 = scmp.eq.s32.totalorder %s13, 0
      %p138 = por %p136, %p137
      %p139 = scmp.ne.s32.totalorder %s128, %s131
      %p140 = scmp.eq.s32.totalorder %s18, 1
      %p141 = por %p139, %p140
      %p142 = scmp.ne.s32.totalorder %s131, %s132
      %p143 = scmp.eq.s32.totalorder %s18, 0
      %p144 = por %p142, %p143
      %p145 = scmp.ne.s32.totalorder %s131, %s132
      %p146 = scmp.eq.s32.totalorder %s19, 1
      %p147 = por %p145, %p146
      %p149 = scmp.ne.s32.totalorder %s132, %s148
      %p150 = scmp.eq.s32.totalorder %s19, 0
      %p151 = por %p149, %p150
      %p152 = scmp.le.s32.totalorder 1, %s13
      %p153 = scmp.lt.s32.totalorder %s13, 3
      %p154 = pnand %p152, %p153
      %p155 = pneg %p154
      // Predicated region
      $region9: #{tpu_custom_call.1} parent=5 // pred_check
        _
      $region10: #{tpu_custom_call.1} parent=5 // pred_check_branch
        %157 = sbr.rel (%p154) target = $region12
      $region11: #{tpu_custom_call.1} parent=5 // pred_region
        %s158 = ssub.s32 %s13, 1
        // Predicated region
        $region13: #{tpu_custom_call.1} parent=11 // pred_check
          %p159 = pneg %p74
        $region14: #{tpu_custom_call.1} parent=11 // pred_check_branch
          %161 = sbr.rel (%p159) target = $region16
        $region15: #{tpu_custom_call.1} parent=11 // pred_region
          _
        $region16: #{tpu_custom_call.1} parent=11 // pred_fallthru
          _
        // Predicated region
        $region17: #{tpu_custom_call.1} parent=11 // pred_check
          %p162 = pneg %p95
        $region18: #{tpu_custom_call.1} parent=11 // pred_check_branch
          %164 = sbr.rel (%p162) target = $region20
        $region19: #{tpu_custom_call.1} parent=11 // pred_region
          _
        $region20: #{tpu_custom_call.1} parent=11 // pred_fallthru
          _
        // Predicated region
        $region21: #{tpu_custom_call.1} parent=11 // pred_check
          %p165 = pneg %p116
        $region22: #{tpu_custom_call.1} parent=11 // pred_check_branch
          %167 = sbr.rel (%p165) target = $region24
        $region23: #{tpu_custom_call.1} parent=11 // pred_region
          _
        $region24: #{tpu_custom_call.1} parent=11 // pred_fallthru
          _
      $region12: #{tpu_custom_call.1} parent=5 // pred_fallthru
        _
      %p168 = scmp.lt.s32.totalorder %s13, 2
      // Predicated region
      $region25: #{tpu_custom_call.1} parent=5 // pred_check
        %p169 = pneg %p168
      $region26: #{tpu_custom_call.1} parent=5 // pred_check_branch
        %171 = sbr.rel (%p169) target = $region28
      $region27: #{tpu_custom_call.1} parent=5 // pred_region
        // Predicated region
        $region29: #{tpu_custom_call.1} parent=27 // pred_check
          %p172 = pneg %p47
        $region30: #{tpu_custom_call.1} parent=27 // pred_check_branch
          %174 = sbr.rel (%p172) target = $region32
        $region31: #{tpu_custom_call.1} parent=27 // pred_region
          %s175 = smul.u32 2, %s21
          %p176 = scmp.lt.s32.totalorder %s20, 1
          %s177 = scalar_select %p176, %s20, 1
          %p178 = scmp.lt.s32.totalorder %s175, 1
          %s179 = scalar_select %p178, %s175, 1
          %s180 = smul.addr %s177, 4
          %s181 = sadd.s32 %s179, %s180
          %s182 = smul.addr %s181, 8
          %s183 = scalar_lea.vmem %s0, %s182
          %s184 = smul.u32 2, %s21
        $region32: #{tpu_custom_call.1} parent=27 // pred_fallthru
          _
      $region28: #{tpu_custom_call.1} parent=5 // pred_fallthru
        _
      %p185 = scmp.le.s32.totalorder 1, %s13
      %p186 = scmp.lt.s32.totalorder %s13, 3
      %p187 = pnand %p185, %p186
      %p188 = pneg %p187
      // Predicated region
      $region33: #{tpu_custom_call.1} parent=5 // pred_check
        _
      $region34: #{tpu_custom_call.1} parent=5 // pred_check_branch
        %190 = sbr.rel (%p187) target = $region36
      $region35: #{tpu_custom_call.1} parent=5 // pred_region
        %s191 = ssub.s32 %s13, 1
        %s192 = smul.u32 2, %s23
        %p193 = scmp.lt.s32.totalorder %s22, 1
        %s194 = scalar_select %p193, %s22, 1
        %p195 = scmp.lt.s32.totalorder %s192, 1
        %s196 = scalar_select %p195, %s192, 1
        %s197 = smul.addr %s194, 4
        %s198 = sadd.s32 %s196, %s197
        %s199 = smul.addr %s198, 8
        %s200 = scalar_lea.vmem %s0, %s199
        %p201 = pneg %p53
        %p202 = pneg %p50
        %p203 = pneg %p74
        %p204 = pneg %p71
        %p205 = pneg %p95
        %p206 = pneg %p92
        %p207 = pneg %p116
        %p208 = pneg %p113
        %p209 = pneg %p144
        %p210 = pneg %p141
        %s211 = sand.u32 %s131, 1
        %s212 = scalar_lea.sflag [#allocation3], %s211
        %s213 = sand.u32 %s131, 1
        %s214 = smul.addr %s213, 64
        %s215 = scalar_lea.vmem [#allocation2], %s214
        %s216 = smul.u32 2, %s23
        %p217 = scmp.lt.s32.totalorder %s22, 1
        %s218 = scalar_select %p217, %s22, 1
        %p219 = scmp.lt.s32.totalorder %s216, 1
        %s220 = scalar_select %p219, %s216, 1
        %s221 = smul.addr %s218, 4
        %s222 = sadd.s32 %s220, %s221
        %s223 = smul.addr %s222, 8
        %s224 = scalar_lea.vmem %s0, %s223
        %s225 = smul.u32 2, %s23
        %s226 = smul.u32 2, %s23
        %v227 = vld [vmem:[%s224] sm:$0xff]
        %v228 = vld [vmem:[%s224 + $0x8] sm:$0xff]
        %v229 = vld [vmem:[%s224 + $0x10] sm:$0xff]
        %v230 = vld [vmem:[%s224 + $0x18] sm:$0xff]
        %231 = vrot.lane.b32.xlu0 %v227, 3
        %v232 = vpop.permute.xlu0 %231
        %233 = vrot.lane.b32.xlu0 %v229, 3
        %v234 = vpop.permute.xlu0 %233
        %235 = vrot.lane.b32.xlu0 %v228, 3
        %v236 = vpop.permute.xlu0 %235
        %237 = vrot.lane.b32.xlu0 %v230, 3
        %v238 = vpop.permute.xlu0 %237
        %v239 = vlaneseq
        %v240 = vand.u32 %v239, 127
        %vm241 = vcmp.lt.s32.totalorder %v240, 3
        %v242 = vsel %vm241, %v232, %v236
        %v243 = vsel %vm241, %v234, %v238
        %v244 = vsel %vm241, %v236, %v232
        %v245 = vsel %vm241, %v238, %v234
        %v246 = vld [vmem:[%s2] sm:$0x3]
        %v248 = vlaneseq
        %v249 = vshrl.u32 %v248, 7
        %v250 = vsub.s32 0, %v249
        %v251 = vrot.slane %v246, %v250
        %v252 = vlaneseq
        %v253 = vshrl.u32 %v252, 7
        %v254 = vsub.s32 1, %v253
        %v255 = vrot.slane %v246, %v254
        %v258 = vmul.f32 %v244, %v251
        %v259 = vmul.f32 %v242, %v255
        %v260 = vmul.f32 %v245, %v251
        %v261 = vmul.f32 %v243, %v255
        %v262 = vld [vmem:[%s1] sm:$0xff]
        %v263 = vld [vmem:[%s1 + $0x8] sm:$0xff]
        %v264 = vld [vmem:[%s1 + $0x10] sm:$0xff]
        %v265 = vld [vmem:[%s1 + $0x18] sm:$0xff]
        %266 = vrot.lane.b32.xlu0 %v227, 2
        %v267 = vpop.permute.xlu0 %266
        %268 = vrot.lane.b32.xlu0 %v229, 2
        %v269 = vpop.permute.xlu0 %268
        %270 = vrot.lane.b32.xlu0 %v228, 2
        %v271 = vpop.permute.xlu0 %270
        %272 = vrot.lane.b32.xlu0 %v230, 2
        %v273 = vpop.permute.xlu0 %272
        %vm274 = vcmp.lt.s32.totalorder %v240, 2
        %v275 = vsel %vm274, %v267, %v271
        %v276 = vsel %vm274, %v269, %v273
        %v277 = vsel %vm274, %v271, %v267
        %v278 = vsel %vm274, %v273, %v269
        %s279 = scalar_lea.vmem %s2, 2
        %v280 = vld [vmem:[%s279] sm:$0x3]
        %v282 = vlaneseq
        %v283 = vshrl.u32 %v282, 7
        %v284 = vsub.s32 0, %v283
        %v285 = vrot.slane %v280, %v284
        %v286 = vlaneseq
        %v287 = vshrl.u32 %v286, 7
        %v288 = vsub.s32 1, %v287
        %v289 = vrot.slane %v280, %v288
        %v292 = vmul.f32 %v277, %v285
        %v293 = vmul.f32 %v275, %v289
        %v294 = vmul.f32 %v278, %v285
        %v295 = vmul.f32 %v276, %v289
        %s296 = scalar_lea.vmem %s1, 32
        %v297 = vld [vmem:[%s296] sm:$0xff]
        %v298 = vld [vmem:[%s296 + $0x8] sm:$0xff]
        %v299 = vld [vmem:[%s296 + $0x10] sm:$0xff]
        %v300 = vld [vmem:[%s296 + $0x18] sm:$0xff]
        %vm301 = vcmask 130048
        %v303 = vsel %vm301, %v297, 0
        %v306 = vsel %vm301, %v298, 0
        %v309 = vsel %vm301, %v299, 0
        %v312 = vsel %vm301, %v300, 0
        %314 = vmatprep.subr.mxu0 %v293
        %315 = vmatpush1.msra.mxu0 %v292
        %316 = vmatprep.subr.mxu0 %v295
        %317 = vmatpush1.msra.mxu0 %v294
        %318 = vmatprep.subr.mxu0 0.0
        %319 = vmatpush1.msra.mxu0 0.0
        %320 = vmatprep.subr.mxu0 0.0
        %321 = vmatpush1.msra.mxu0 0.0
        %322 = vmatprep.subr.mxu0 0.0
        %323 = vmatpush1.msra.mxu0 0.0
        %324 = vmatprep.subr.mxu0 0.0
        %325 = vmatpush1.msra.mxu0 0.0
        %326 = vmatprep.subr.mxu0 0.0
        %327 = vmatpush1.msra.mxu0 0.0
        %328 = vmatprep.subr.mxu0 0.0
        %329 = vmatpush1.msra.mxu0 0.0
        %330 = vmatprep.subr.mxu0 0.0
        %331 = vmatpush1.msra.mxu0 0.0
        %332 = vmatprep.subr.mxu0 0.0
        %333 = vmatpush1.msra.mxu0 0.0
        %334 = vmatprep.subr.mxu0 0.0
        %335 = vmatpush1.msra.mxu0 0.0
        %336 = vmatprep.subr.mxu0 0.0
        %337 = vmatpush1.msra.mxu0 0.0
        %338 = vmatprep.subr.mxu0 0.0
        %339 = vmatpush1.msra.mxu0 0.0
        %340 = vmatprep.subr.mxu0 0.0
        %341 = vmatpush1.msra.mxu0 0.0
        %342 = vmatprep.subr.mxu0 0.0
        %343 = vmatpush1.msra.mxu0 0.0
        %344 = vmatprep.subr.mxu0 0.0
        %345 = vmatpush1.msra.mxu0 0.0
        %346 = vmatprep.subr.mxu0 0.0
        %347 = vmatpush1.msra.mxu0 0.0
        %348 = vmatprep.subr.mxu0 0.0
        %349 = vmatpush1.msra.mxu0 0.0
        %350 = vmatprep.subr.mxu0 0.0
        %351 = vmatpush1.msra.mxu0 0.0
        %352 = vmatprep.subr.mxu0 0.0
        %353 = vmatpush1.msra.mxu0 0.0
        %354 = vmatprep.subr.mxu0 0.0
        %355 = vmatpush1.msra.mxu0 0.0
        %356 = vmatprep.subr.mxu0 0.0
        %357 = vmatpush1.msra.mxu0 0.0
        %358 = vmatprep.subr.mxu0 0.0
        %359 = vmatpush1.msra.mxu0 0.0
        %360 = vmatprep.subr.mxu0 0.0
        %361 = vmatpush1.msra.mxu0 0.0
        %362 = vmatprep.subr.mxu0 0.0
        %363 = vmatpush1.msra.mxu0 0.0
        %364 = vmatprep.subr.mxu0 0.0
        %365 = vmatpush1.msra.mxu0 0.0
        %366 = vmatprep.subr.mxu0 0.0
        %367 = vmatpush1.msra.mxu0 0.0
        %368 = vmatprep.subr.mxu0 0.0
        %369 = vmatpush1.msra.mxu0 0.0
        %370 = vmatprep.subr.mxu0 0.0
        %371 = vmatpush1.msra.mxu0 0.0
        %372 = vmatprep.subr.mxu0 0.0
        %373 = vmatpush1.msra.mxu0 0.0
        %374 = vmatprep.subr.mxu0 0.0
        %375 = vmatpush1.msra.mxu0 0.0
        %376 = vmatprep.subr.mxu0 0.0
        %377 = vmatpush1.msra.mxu0 0.0
        %378 = vmatprep.mubr.f32.mxu0 0.0
        %379 = vmatmul.mubr.f32.gmra.mrb[0].mxu0 %v303
        %v380 = vpop.f32.mrb[0].mxu0
        %v381 = vadd.f32 0.0, %v380
        %v382 = vpop.f32.mrb[0].mxu0
        %v383 = vadd.f32 0.0, %v382
        %384 = vmatprep.mubr.f32.mxu0 0.0
        %385 = vmatmul.mubr.f32.gmra.mrb[0].mxu0 %v306
        %v386 = vpop.f32.mrb[0].mxu0
        %v387 = vadd.f32 0.0, %v386
        %v388 = vpop.f32.mrb[0].mxu0
        %v389 = vadd.f32 0.0, %v388
        %390 = vmatprep.mubr.f32.mxu0 0.0
        %391 = vmatmul.mubr.f32.gmra.mrb[0].mxu0 %v309
        %v392 = vpop.f32.mrb[0].mxu0
        %v393 = vadd.f32 0.0, %v392
        %v394 = vpop.f32.mrb[0].mxu0
        %v395 = vadd.f32 0.0, %v394
        %396 = vmatprep.mubr.f32.mxu0 0.0
        %397 = vmatmul.mubr.f32.gmra.mrb[0].mxu0 %v312
        %v398 = vpop.f32.mrb[0].mxu0
        %v399 = vadd.f32 0.0, %v398
        %v400 = vpop.f32.mrb[0].mxu0
        %v401 = vadd.f32 0.0, %v400
        %402 = vdwg.mxu0
        %v404 = vsel %vm301, %v262, 0
        %v407 = vsel %vm301, %v263, 0
        %v410 = vsel %vm301, %v264, 0
        %v413 = vsel %vm301, %v265, 0
        %415 = vmatprep.subr.mxu0 %v259
        %416 = vmatpush1.msra.mxu0 %v258
        %417 = vmatprep.subr.mxu0 %v261
        %418 = vmatpush1.msra.mxu0 %v260
        %419 = vmatprep.subr.mxu0 0.0
        %420 = vmatpush1.msra.mxu0 0.0
        %421 = vmatprep.subr.mxu0 0.0
        %422 = vmatpush1.msra.mxu0 0.0
        %423 = vmatprep.subr.mxu0 0.0
        %424 = vmatpush1.msra.mxu0 0.0
        %425 = vmatprep.subr.mxu0 0.0
        %426 = vmatpush1.msra.mxu0 0.0
        %427 = vmatprep.subr.mxu0 0.0
        %428 = vmatpush1.msra.mxu0 0.0
        %429 = vmatprep.subr.mxu0 0.0
        %430 = vmatpush1.msra.mxu0 0.0
        %431 = vmatprep.subr.mxu0 0.0
        %432 = vmatpush1.msra.mxu0 0.0
        %433 = vmatprep.subr.mxu0 0.0
        %434 = vmatpush1.msra.mxu0 0.0
        %435 = vmatprep.subr.mxu0 0.0
        %436 = vmatpush1.msra.mxu0 0.0
        %437 = vmatprep.subr.mxu0 0.0
        %438 = vmatpush1.msra.mxu0 0.0
        %439 = vmatprep.subr.mxu0 0.0
        %440 = vmatpush1.msra.mxu0 0.0
        %441 = vmatprep.subr.mxu0 0.0
        %442 = vmatpush1.msra.mxu0 0.0
        %443 = vmatprep.subr.mxu0 0.0
        %444 = vmatpush1.msra.mxu0 0.0
        %445 = vmatprep.subr.mxu0 0.0
        %446 = vmatpush1.msra.mxu0 0.0
        %447 = vmatprep.subr.mxu0 0.0
        %448 = vmatpush1.msra.mxu0 0.0
        %449 = vmatprep.subr.mxu0 0.0
        %450 = vmatpush1.msra.mxu0 0.0
        %451 = vmatprep.subr.mxu0 0.0
        %452 = vmatpush1.msra.mxu0 0.0
        %453 = vmatprep.subr.mxu0 0.0
        %454 = vmatpush1.msra.mxu0 0.0
        %455 = vmatprep.subr.mxu0 0.0
        %456 = vmatpush1.msra.mxu0 0.0
        %457 = vmatprep.subr.mxu0 0.0
        %458 = vmatpush1.msra.mxu0 0.0
        %459 = vmatprep.subr.mxu0 0.0
        %460 = vmatpush1.msra.mxu0 0.0
        %461 = vmatprep.subr.mxu0 0.0
        %462 = vmatpush1.msra.mxu0 0.0
        %463 = vmatprep.subr.mxu0 0.0
        %464 = vmatpush1.msra.mxu0 0.0
        %465 = vmatprep.subr.mxu0 0.0
        %466 = vmatpush1.msra.mxu0 0.0
        %467 = vmatprep.subr.mxu0 0.0
        %468 = vmatpush1.msra.mxu0 0.0
        %469 = vmatprep.subr.mxu0 0.0
        %470 = vmatpush1.msra.mxu0 0.0
        %471 = vmatprep.subr.mxu0 0.0
        %472 = vmatpush1.msra.mxu0 0.0
        %473 = vmatprep.subr.mxu0 0.0
        %474 = vmatpush1.msra.mxu0 0.0
        %475 = vmatprep.subr.mxu0 0.0
        %476 = vmatpush1.msra.mxu0 0.0
        %477 = vmatprep.subr.mxu0 0.0
        %478 = vmatpush1.msra.mxu0 0.0
        %479 = vmatprep.mubr.f32.mxu0 0.0
        %480 = vmatmul.mubr.f32.gmra.mrb[0].mxu0 %v404
        %v481 = vpop.f32.mrb[0].mxu0
        %v482 = vadd.f32 %v381, %v481
        %v483 = vpop.f32.mrb[0].mxu0
        %v484 = vadd.f32 %v383, %v483
        %485 = vmatprep.mubr.f32.mxu0 0.0
        %486 = vmatmul.mubr.f32.gmra.mrb[0].mxu0 %v407
        %v487 = vpop.f32.mrb[0].mxu0
        %v488 = vadd.f32 %v387, %v487
        %v489 = vpop.f32.mrb[0].mxu0
        %v490 = vadd.f32 %v389, %v489
        %491 = vmatprep.mubr.f32.mxu0 0.0
        %492 = vmatmul.mubr.f32.gmra.mrb[0].mxu0 %v410
        %v493 = vpop.f32.mrb[0].mxu0
        %v494 = vadd.f32 %v393, %v493
        %v495 = vpop.f32.mrb[0].mxu0
        %v496 = vadd.f32 %v395, %v495
        %497 = vmatprep.mubr.f32.mxu0 0.0
        %498 = vmatmul.mubr.f32.gmra.mrb[0].mxu0 %v413
        %v499 = vpop.f32.mrb[0].mxu0
        %v500 = vadd.f32 %v399, %v499
        %v501 = vpop.f32.mrb[0].mxu0
        %v502 = vadd.f32 %v401, %v501
        %503 = vdwg.mxu0
        %504 = vrot.lane.b32.xlu0 %v227, 1
        %v505 = vpop.permute.xlu0 %504
        %506 = vrot.lane.b32.xlu0 %v229, 1
        %v507 = vpop.permute.xlu0 %506
        %508 = vrot.lane.b32.xlu0 %v228, 1
        %v509 = vpop.permute.xlu0 %508
        %510 = vrot.lane.b32.xlu0 %v230, 1
        %v511 = vpop.permute.xlu0 %510
        %vm512 = vcmp.lt.s32.totalorder %v240, 1
        %v513 = vsel %vm512, %v505, %v509
        %v514 = vsel %vm512, %v507, %v511
        %v515 = vsel %vm512, %v509, %v505
        %v516 = vsel %vm512, %v511, %v507
        %s517 = scalar_lea.vmem %s2, 4
        %v518 = vld [vmem:[%s517] sm:$0x3]
        %v520 = vlaneseq
        %v521 = vshrl.u32 %v520, 7
        %v522 = vsub.s32 0, %v521
        %v523 = vrot.slane %v518, %v522
        %v524 = vlaneseq
        %v525 = vshrl.u32 %v524, 7
        %v526 = vsub.s32 1, %v525
        %v527 = vrot.slane %v518, %v526
        %v530 = vmul.f32 %v515, %v523
        %v531 = vmul.f32 %v513, %v527
        %v532 = vmul.f32 %v516, %v523
        %v533 = vmul.f32 %v514, %v527
        %s534 = scalar_lea.vmem %s1, 64
        %v535 = vld [vmem:[%s534] sm:$0xff]
        %v536 = vld [vmem:[%s534 + $0x8] sm:$0xff]
        %v537 = vld [vmem:[%s534 + $0x10] sm:$0xff]
        %v538 = vld [vmem:[%s534 + $0x18] sm:$0xff]
        %v540 = vsel %vm301, %v535, 0
        %v543 = vsel %vm301, %v536, 0
        %v546 = vsel %vm301, %v537, 0
        %v549 = vsel %vm301, %v538, 0
        %551 = vmatprep.subr.mxu0 %v531
        %552 = vmatpush1.msra.mxu0 %v530
        %553 = vmatprep.subr.mxu0 %v533
        %554 = vmatpush1.msra.mxu0 %v532
        %555 = vmatprep.subr.mxu0 0.0
        %556 = vmatpush1.msra.mxu0 0.0
        %557 = vmatprep.subr.mxu0 0.0
        %558 = vmatpush1.msra.mxu0 0.0
        %559 = vmatprep.subr.mxu0 0.0
        %560 = vmatpush1.msra.mxu0 0.0
        %561 = vmatprep.subr.mxu0 0.0
        %562 = vmatpush1.msra.mxu0 0.0
        %563 = vmatprep.subr.mxu0 0.0
        %564 = vmatpush1.msra.mxu0 0.0
        %565 = vmatprep.subr.mxu0 0.0
        %566 = vmatpush1.msra.mxu0 0.0
        %567 = vmatprep.subr.mxu0 0.0
        %568 = vmatpush1.msra.mxu0 0.0
        %569 = vmatprep.subr.mxu0 0.0
        %570 = vmatpush1.msra.mxu0 0.0
        %571 = vmatprep.subr.mxu0 0.0
        %572 = vmatpush1.msra.mxu0 0.0
        %573 = vmatprep.subr.mxu0 0.0
        %574 = vmatpush1.msra.mxu0 0.0
        %575 = vmatprep.subr.mxu0 0.0
        %576 = vmatpush1.msra.mxu0 0.0
        %577 = vmatprep.subr.mxu0 0.0
        %578 = vmatpush1.msra.mxu0 0.0
        %579 = vmatprep.subr.mxu0 0.0
        %580 = vmatpush1.msra.mxu0 0.0
        %581 = vmatprep.subr.mxu0 0.0
        %582 = vmatpush1.msra.mxu0 0.0
        %583 = vmatprep.subr.mxu0 0.0
        %584 = vmatpush1.msra.mxu0 0.0
        %585 = vmatprep.subr.mxu0 0.0
        %586 = vmatpush1.msra.mxu0 0.0
        %587 = vmatprep.subr.mxu0 0.0
        %588 = vmatpush1.msra.mxu0 0.0
        %589 = vmatprep.subr.mxu0 0.0
        %590 = vmatpush1.msra.mxu0 0.0
        %591 = vmatprep.subr.mxu0 0.0
        %592 = vmatpush1.msra.mxu0 0.0
        %593 = vmatprep.subr.mxu0 0.0
        %594 = vmatpush1.msra.mxu0 0.0
        %595 = vmatprep.subr.mxu0 0.0
        %596 = vmatpush1.msra.mxu0 0.0
        %597 = vmatprep.subr.mxu0 0.0
        %598 = vmatpush1.msra.mxu0 0.0
        %599 = vmatprep.subr.mxu0 0.0
        %600 = vmatpush1.msra.mxu0 0.0
        %601 = vmatprep.subr.mxu0 0.0
        %602 = vmatpush1.msra.mxu0 0.0
        %603 = vmatprep.subr.mxu0 0.0
        %604 = vmatpush1.msra.mxu0 0.0
        %605 = vmatprep.subr.mxu0 0.0
        %606 = vmatpush1.msra.mxu0 0.0
        %607 = vmatprep.subr.mxu0 0.0
        %608 = vmatpush1.msra.mxu0 0.0
        %609 = vmatprep.subr.mxu0 0.0
        %610 = vmatpush1.msra.mxu0 0.0
        %611 = vmatprep.subr.mxu0 0.0
        %612 = vmatpush1.msra.mxu0 0.0
        %613 = vmatprep.subr.mxu0 0.0
        %614 = vmatpush1.msra.mxu0 0.0
        %615 = vmatprep.mubr.f32.mxu0 0.0
        %616 = vmatmul.mubr.f32.gmra.mrb[0].mxu0 %v540
        %v617 = vpop.f32.mrb[0].mxu0
        %v618 = vadd.f32 0.0, %v617
        %v619 = vpop.f32.mrb[0].mxu0
        %v620 = vadd.f32 0.0, %v619
        %621 = vmatprep.mubr.f32.mxu0 0.0
        %622 = vmatmul.mubr.f32.gmra.mrb[0].mxu0 %v543
        %v623 = vpop.f32.mrb[0].mxu0
        %v624 = vadd.f32 0.0, %v623
        %v625 = vpop.f32.mrb[0].mxu0
        %v626 = vadd.f32 0.0, %v625
        %627 = vmatprep.mubr.f32.mxu0 0.0
        %628 = vmatmul.mubr.f32.gmra.mrb[0].mxu0 %v546
        %v629 = vpop.f32.mrb[0].mxu0
        %v630 = vadd.f32 0.0, %v629
        %v631 = vpop.f32.mrb[0].mxu0
        %v632 = vadd.f32 0.0, %v631
        %633 = vmatprep.mubr.f32.mxu0 0.0
        %634 = vmatmul.mubr.f32.gmra.mrb[0].mxu0 %v549
        %v635 = vpop.f32.mrb[0].mxu0
        %v636 = vadd.f32 0.0, %v635
        %v637 = vpop.f32.mrb[0].mxu0
        %v638 = vadd.f32 0.0, %v637
        %639 = vdwg.mxu0
        %v640 = vadd.f32 %v482, %v618
        %v641 = vadd.f32 %v484, %v620
        %v642 = vadd.f32 %v488, %v624
        %v643 = vadd.f32 %v490, %v626
        %v644 = vadd.f32 %v494, %v630
        %v645 = vadd.f32 %v496, %v632
        %v646 = vadd.f32 %v500, %v636
        %v647 = vadd.f32 %v502, %v638
        %s648 = scalar_lea.vmem %s2, 6
        %v649 = vld [vmem:[%s648] sm:$0x3]
        %v651 = vlaneseq
        %v652 = vshrl.u32 %v651, 7
        %v653 = vsub.s32 0, %v652
        %v654 = vrot.slane %v649, %v653
        %v655 = vlaneseq
        %v656 = vshrl.u32 %v655, 7
        %v657 = vsub.s32 1, %v656
        %v658 = vrot.slane %v649, %v657
        %v661 = vmul.f32 %v227, %v654
        %v662 = vmul.f32 %v228, %v658
        %v663 = vmul.f32 %v229, %v654
        %v664 = vmul.f32 %v230, %v658
        %s665 = scalar_lea.vmem %s1, 96
        %v666 = vld [vmem:[%s665] sm:$0xff]
        %v667 = vld [vmem:[%s665 + $0x8] sm:$0xff]
        %v668 = vld [vmem:[%s665 + $0x10] sm:$0xff]
        %v669 = vld [vmem:[%s665 + $0x18] sm:$0xff]
        %v671 = vsel %vm301, %v666, 0
        %v674 = vsel %vm301, %v667, 0
        %v677 = vsel %vm301, %v668, 0
        %v680 = vsel %vm301, %v669, 0
        %682 = vmatprep.subr.mxu0 %v662
        %683 = vmatpush1.msra.mxu0 %v661
        %684 = vmatprep.subr.mxu0 %v664
        %685 = vmatpush1.msra.mxu0 %v663
        %686 = vmatprep.subr.mxu0 0.0
        %687 = vmatpush1.msra.mxu0 0.0
        %688 = vmatprep.subr.mxu0 0.0
        %689 = vmatpush1.msra.mxu0 0.0
        %690 = vmatprep.subr.mxu0 0.0
        %691 = vmatpush1.msra.mxu0 0.0
        %692 = vmatprep.subr.mxu0 0.0
        %693 = vmatpush1.msra.mxu0 0.0
        %694 = vmatprep.subr.mxu0 0.0
        %695 = vmatpush1.msra.mxu0 0.0
        %696 = vmatprep.subr.mxu0 0.0
        %697 = vmatpush1.msra.mxu0 0.0
        %698 = vmatprep.subr.mxu0 0.0
        %699 = vmatpush1.msra.mxu0 0.0
        %700 = vmatprep.subr.mxu0 0.0
        %701 = vmatpush1.msra.mxu0 0.0
        %702 = vmatprep.subr.mxu0 0.0
        %703 = vmatpush1.msra.mxu0 0.0
        %704 = vmatprep.subr.mxu0 0.0
        %705 = vmatpush1.msra.mxu0 0.0
        %706 = vmatprep.subr.mxu0 0.0
        %707 = vmatpush1.msra.mxu0 0.0
        %708 = vmatprep.subr.mxu0 0.0
        %709 = vmatpush1.msra.mxu0 0.0
        %710 = vmatprep.subr.mxu0 0.0
        %711 = vmatpush1.msra.mxu0 0.0
        %712 = vmatprep.subr.mxu0 0.0
        %713 = vmatpush1.msra.mxu0 0.0
        %714 = vmatprep.subr.mxu0 0.0
        %715 = vmatpush1.msra.mxu0 0.0
        %716 = vmatprep.subr.mxu0 0.0
        %717 = vmatpush1.msra.mxu0 0.0
        %718 = vmatprep.subr.mxu0 0.0
        %719 = vmatpush1.msra.mxu0 0.0
        %720 = vmatprep.subr.mxu0 0.0
        %721 = vmatpush1.msra.mxu0 0.0
        %722 = vmatprep.subr.mxu0 0.0
        %723 = vmatpush1.msra.mxu0 0.0
        %724 = vmatprep.subr.mxu0 0.0
        %725 = vmatpush1.msra.mxu0 0.0
        %726 = vmatprep.subr.mxu0 0.0
        %727 = vmatpush1.msra.mxu0 0.0
        %728 = vmatprep.subr.mxu0 0.0
        %729 = vmatpush1.msra.mxu0 0.0
        %730 = vmatprep.subr.mxu0 0.0
        %731 = vmatpush1.msra.mxu0 0.0
        %732 = vmatprep.subr.mxu0 0.0
        %733 = vmatpush1.msra.mxu0 0.0
        %734 = vmatprep.subr.mxu0 0.0
        %735 = vmatpush1.msra.mxu0 0.0
        %736 = vmatprep.subr.mxu0 0.0
        %737 = vmatpush1.msra.mxu0 0.0
        %738 = vmatprep.subr.mxu0 0.0
        %739 = vmatpush1.msra.mxu0 0.0
        %740 = vmatprep.subr.mxu0 0.0
        %741 = vmatpush1.msra.mxu0 0.0
        %742 = vmatprep.subr.mxu0 0.0
        %743 = vmatpush1.msra.mxu0 0.0
        %744 = vmatprep.subr.mxu0 0.0
        %745 = vmatpush1.msra.mxu0 0.0
        %746 = vmatprep.mubr.f32.mxu0 0.0
        %747 = vmatmul.mubr.f32.gmra.mrb[0].mxu0 %v671
        %v748 = vpop.f32.mrb[0].mxu0
        %v749 = vadd.f32 0.0, %v748
        %v750 = vpop.f32.mrb[0].mxu0
        %v751 = vadd.f32 0.0, %v750
        %752 = vmatprep.mubr.f32.mxu0 0.0
        %753 = vmatmul.mubr.f32.gmra.mrb[0].mxu0 %v674
        %v754 = vpop.f32.mrb[0].mxu0
        %v755 = vadd.f32 0.0, %v754
        %v756 = vpop.f32.mrb[0].mxu0
        %v757 = vadd.f32 0.0, %v756
        %758 = vmatprep.mubr.f32.mxu0 0.0
        %759 = vmatmul.mubr.f32.gmra.mrb[0].mxu0 %v677
        %v760 = vpop.f32.mrb[0].mxu0
        %v761 = vadd.f32 0.0, %v760
        %v762 = vpop.f32.mrb[0].mxu0
        %v763 = vadd.f32 0.0, %v762
        %764 = vmatprep.mubr.f32.mxu0 0.0
        %765 = vmatmul.mubr.f32.gmra.mrb[0].mxu0 %v680
        %v766 = vpop.f32.mrb[0].mxu0
        %v767 = vadd.f32 0.0, %v766
        %v768 = vpop.f32.mrb[0].mxu0
        %v769 = vadd.f32 0.0, %v768
        %770 = vdwg.mxu0
        %v771 = vadd.f32 %v640, %v749
        %v772 = vadd.f32 %v641, %v751
        %v773 = vadd.f32 %v642, %v755
        %v774 = vadd.f32 %v643, %v757
        %v775 = vadd.f32 %v644, %v761
        %v776 = vadd.f32 %v645, %v763
        %v777 = vadd.f32 %v646, %v767
        %v778 = vadd.f32 %v647, %v769
        %779 = vrot.lane.b32.xlu0 %v227, 127
        %v780 = vpop.permute.xlu0 %779
        %781 = vrot.lane.b32.xlu0 %v229, 127
        %v782 = vpop.permute.xlu0 %781
        %783 = vrot.lane.b32.xlu0 %v228, 127
        %v784 = vpop.permute.xlu0 %783
        %785 = vrot.lane.b32.xlu0 %v230, 127
        %v786 = vpop.permute.xlu0 %785
        %vm787 = vcmp.lt.s32.totalorder %v240, 127
        %v788 = vsel %vm787, %v780, %v784
        %v789 = vsel %vm787, %v782, %v786
        %v790 = vsel %vm787, %v784, %v780
        %v791 = vsel %vm787, %v786, %v782
        %s792 = scalar_lea.vmem %s2, 8
        %v793 = vld [vmem:[%s792] sm:$0x3]
        %v795 = vlaneseq
        %v796 = vshrl.u32 %v795, 7
        %v797 = vsub.s32 0, %v796
        %v798 = vrot.slane %v793, %v797
        %v799 = vlaneseq
        %v800 = vshrl.u32 %v799, 7
        %v801 = vsub.s32 1, %v800
        %v802 = vrot.slane %v793, %v801
        %v805 = vmul.f32 %v788, %v798
        %v806 = vmul.f32 %v790, %v802
        %v807 = vmul.f32 %v789, %v798
        %v808 = vmul.f32 %v791, %v802
        %s809 = scalar_lea.vmem %s1, 128
        %v810 = vld [vmem:[%s809] sm:$0xff]
        %v811 = vld [vmem:[%s809 + $0x8] sm:$0xff]
        %v812 = vld [vmem:[%s809 + $0x10] sm:$0xff]
        %v813 = vld [vmem:[%s809 + $0x18] sm:$0xff]
        %v815 = vsel %vm301, %v810, 0
        %v818 = vsel %vm301, %v811, 0
        %v821 = vsel %vm301, %v812, 0
        %v824 = vsel %vm301, %v813, 0
        %826 = vmatprep.subr.mxu0 %v806
        %827 = vmatpush1.msra.mxu0 %v805
        %828 = vmatprep.subr.mxu0 %v808
        %829 = vmatpush1.msra.mxu0 %v807
        %830 = vmatprep.subr.mxu0 0.0
        %831 = vmatpush1.msra.mxu0 0.0
        %832 = vmatprep.subr.mxu0 0.0
        %833 = vmatpush1.msra.mxu0 0.0
        %834 = vmatprep.subr.mxu0 0.0
        %835 = vmatpush1.msra.mxu0 0.0
        %836 = vmatprep.subr.mxu0 0.0
        %837 = vmatpush1.msra.mxu0 0.0
        %838 = vmatprep.subr.mxu0 0.0
        %839 = vmatpush1.msra.mxu0 0.0
        %840 = vmatprep.subr.mxu0 0.0
        %841 = vmatpush1.msra.mxu0 0.0
        %842 = vmatprep.subr.mxu0 0.0
        %843 = vmatpush1.msra.mxu0 0.0
        %844 = vmatprep.subr.mxu0 0.0
        %845 = vmatpush1.msra.mxu0 0.0
        %846 = vmatprep.subr.mxu0 0.0
        %847 = vmatpush1.msra.mxu0 0.0
        %848 = vmatprep.subr.mxu0 0.0
        %849 = vmatpush1.msra.mxu0 0.0
        %850 = vmatprep.subr.mxu0 0.0
        %851 = vmatpush1.msra.mxu0 0.0
        %852 = vmatprep.subr.mxu0 0.0
        %853 = vmatpush1.msra.mxu0 0.0
        %854 = vmatprep.subr.mxu0 0.0
        %855 = vmatpush1.msra.mxu0 0.0
        %856 = vmatprep.subr.mxu0 0.0
        %857 = vmatpush1.msra.mxu0 0.0
        %858 = vmatprep.subr.mxu0 0.0
        %859 = vmatpush1.msra.mxu0 0.0
        %860 = vmatprep.subr.mxu0 0.0
        %861 = vmatpush1.msra.mxu0 0.0
        %862 = vmatprep.subr.mxu0 0.0
        %863 = vmatpush1.msra.mxu0 0.0
        %864 = vmatprep.subr.mxu0 0.0
        %865 = vmatpush1.msra.mxu0 0.0
        %866 = vmatprep.subr.mxu0 0.0
        %867 = vmatpush1.msra.mxu0 0.0
        %868 = vmatprep.subr.mxu0 0.0
        %869 = vmatpush1.msra.mxu0 0.0
        %870 = vmatprep.subr.mxu0 0.0
        %871 = vmatpush1.msra.mxu0 0.0
        %872 = vmatprep.subr.mxu0 0.0
        %873 = vmatpush1.msra.mxu0 0.0
        %874 = vmatprep.subr.mxu0 0.0
        %875 = vmatpush1.msra.mxu0 0.0
        %876 = vmatprep.subr.mxu0 0.0
        %877 = vmatpush1.msra.mxu0 0.0
        %878 = vmatprep.subr.mxu0 0.0
        %879 = vmatpush1.msra.mxu0 0.0
        %880 = vmatprep.subr.mxu0 0.0
        %881 = vmatpush1.msra.mxu0 0.0
        %882 = vmatprep.subr.mxu0 0.0
        %883 = vmatpush1.msra.mxu0 0.0
        %884 = vmatprep.subr.mxu0 0.0
        %885 = vmatpush1.msra.mxu0 0.0
        %886 = vmatprep.subr.mxu0 0.0
        %887 = vmatpush1.msra.mxu0 0.0
        %888 = vmatprep.subr.mxu0 0.0
        %889 = vmatpush1.msra.mxu0 0.0
        %890 = vmatprep.mubr.f32.mxu0 0.0
        %891 = vmatmul.mubr.f32.gmra.mrb[0].mxu0 %v815
        %v892 = vpop.f32.mrb[0].mxu0
        %v893 = vadd.f32 0.0, %v892
        %v894 = vpop.f32.mrb[0].mxu0
        %v895 = vadd.f32 0.0, %v894
        %896 = vmatprep.mubr.f32.mxu0 0.0
        %897 = vmatmul.mubr.f32.gmra.mrb[0].mxu0 %v818
        %v898 = vpop.f32.mrb[0].mxu0
        %v899 = vadd.f32 0.0, %v898
        %v900 = vpop.f32.mrb[0].mxu0
        %v901 = vadd.f32 0.0, %v900
        %902 = vmatprep.mubr.f32.mxu0 0.0
        %903 = vmatmul.mubr.f32.gmra.mrb[0].mxu0 %v821
        %v904 = vpop.f32.mrb[0].mxu0
        %v905 = vadd.f32 0.0, %v904
        %v906 = vpop.f32.mrb[0].mxu0
        %v907 = vadd.f32 0.0, %v906
        %908 = vmatprep.mubr.f32.mxu0 0.0
        %909 = vmatmul.mubr.f32.gmra.mrb[0].mxu0 %v824
        %v910 = vpop.f32.mrb[0].mxu0
        %v911 = vadd.f32 0.0, %v910
        %v912 = vpop.f32.mrb[0].mxu0
        %v913 = vadd.f32 0.0, %v912
        %914 = vdwg.mxu0
        %v915 = vadd.f32 %v771, %v893
        %v916 = vadd.f32 %v772, %v895
        %v917 = vadd.f32 %v773, %v899
        %v918 = vadd.f32 %v774, %v901
        %v919 = vadd.f32 %v775, %v905
        %v920 = vadd.f32 %v776, %v907
        %v921 = vadd.f32 %v777, %v911
        %v922 = vadd.f32 %v778, %v913
        %923 = vrot.lane.b32.xlu0 %v227, 126
        %v924 = vpop.permute.xlu0 %923
        %925 = vrot.lane.b32.xlu0 %v229, 126
        %v926 = vpop.permute.xlu0 %925
        %927 = vrot.lane.b32.xlu0 %v228, 126
        %v928 = vpop.permute.xlu0 %927
        %929 = vrot.lane.b32.xlu0 %v230, 126
        %v930 = vpop.permute.xlu0 %929
        %vm931 = vcmp.lt.s32.totalorder %v240, 126
        %v932 = vsel %vm931, %v924, %v928
        %v933 = vsel %vm931, %v926, %v930
        %v934 = vsel %vm931, %v928, %v924
        %v935 = vsel %vm931, %v930, %v926
        %s936 = scalar_lea.vmem %s2, 10
        %v937 = vld [vmem:[%s936] sm:$0x3]
        %v939 = vlaneseq
        %v940 = vshrl.u32 %v939, 7
        %v941 = vsub.s32 0, %v940
        %v942 = vrot.slane %v937, %v941
        %v943 = vlaneseq
        %v944 = vshrl.u32 %v943, 7
        %v945 = vsub.s32 1, %v944
        %v946 = vrot.slane %v937, %v945
        %v949 = vmul.f32 %v932, %v942
        %v950 = vmul.f32 %v934, %v946
        %v951 = vmul.f32 %v933, %v942
        %v952 = vmul.f32 %v935, %v946
        %s953 = scalar_lea.vmem %s1, 160
        %v954 = vld [vmem:[%s953] sm:$0xff]
        %v955 = vld [vmem:[%s953 + $0x8] sm:$0xff]
        %v956 = vld [vmem:[%s953 + $0x10] sm:$0xff]
        %v957 = vld [vmem:[%s953 + $0x18] sm:$0xff]
        %v959 = vsel %vm301, %v954, 0
        %v962 = vsel %vm301, %v955, 0
        %v965 = vsel %vm301, %v956, 0
        %v968 = vsel %vm301, %v957, 0
        %970 = vmatprep.subr.mxu0 %v950
        %971 = vmatpush1.msra.mxu0 %v949
        %972 = vmatprep.subr.mxu0 %v952
        %973 = vmatpush1.msra.mxu0 %v951
        %974 = vmatprep.subr.mxu0 0.0
        %975 = vmatpush1.msra.mxu0 0.0
        %976 = vmatprep.subr.mxu0 0.0
        %977 = vmatpush1.msra.mxu0 0.0
        %978 = vmatprep.subr.mxu0 0.0
        %979 = vmatpush1.msra.mxu0 0.0
        %980 = vmatprep.subr.mxu0 0.0
        %981 = vmatpush1.msra.mxu0 0.0
        %982 = vmatprep.subr.mxu0 0.0
        %983 = vmatpush1.msra.mxu0 0.0
        %984 = vmatprep.subr.mxu0 0.0
        %985 = vmatpush1.msra.mxu0 0.0
        %986 = vmatprep.subr.mxu0 0.0
        %987 = vmatpush1.msra.mxu0 0.0
        %988 = vmatprep.subr.mxu0 0.0
        %989 = vmatpush1.msra.mxu0 0.0
        %990 = vmatprep.subr.mxu0 0.0
        %991 = vmatpush1.msra.mxu0 0.0
        %992 = vmatprep.subr.mxu0 0.0
        %993 = vmatpush1.msra.mxu0 0.0
        %994 = vmatprep.subr.mxu0 0.0
        %995 = vmatpush1.msra.mxu0 0.0
        %996 = vmatprep.subr.mxu0 0.0
        %997 = vmatpush1.msra.mxu0 0.0
        %998 = vmatprep.subr.mxu0 0.0
        %999 = vmatpush1.msra.mxu0 0.0
        %1000 = vmatprep.subr.mxu0 0.0
        %1001 = vmatpush1.msra.mxu0 0.0
        %1002 = vmatprep.subr.mxu0 0.0
        %1003 = vmatpush1.msra.mxu0 0.0
        %1004 = vmatprep.subr.mxu0 0.0
        %1005 = vmatpush1.msra.mxu0 0.0
        %1006 = vmatprep.subr.mxu0 0.0
        %1007 = vmatpush1.msra.mxu0 0.0
        %1008 = vmatprep.subr.mxu0 0.0
        %1009 = vmatpush1.msra.mxu0 0.0
        %1010 = vmatprep.subr.mxu0 0.0
        %1011 = vmatpush1.msra.mxu0 0.0
        %1012 = vmatprep.subr.mxu0 0.0
        %1013 = vmatpush1.msra.mxu0 0.0
        %1014 = vmatprep.subr.mxu0 0.0
        %1015 = vmatpush1.msra.mxu0 0.0
        %1016 = vmatprep.subr.mxu0 0.0
        %1017 = vmatpush1.msra.mxu0 0.0
        %1018 = vmatprep.subr.mxu0 0.0
        %1019 = vmatpush1.msra.mxu0 0.0
        %1020 = vmatprep.subr.mxu0 0.0
        %1021 = vmatpush1.msra.mxu0 0.0
        %1022 = vmatprep.subr.mxu0 0.0
        %1023 = vmatpush1.msra.mxu0 0.0
        %1024 = vmatprep.subr.mxu0 0.0
        %1025 = vmatpush1.msra.mxu0 0.0
        %1026 = vmatprep.subr.mxu0 0.0
        %1027 = vmatpush1.msra.mxu0 0.0
        %1028 = vmatprep.subr.mxu0 0.0
        %1029 = vmatpush1.msra.mxu0 0.0
        %1030 = vmatprep.subr.mxu0 0.0
        %1031 = vmatpush1.msra.mxu0 0.0
        %1032 = vmatprep.subr.mxu0 0.0
        %1033 = vmatpush1.msra.mxu0 0.0
        %1034 = vmatprep.mubr.f32.mxu0 0.0
        %1035 = vmatmul.mubr.f32.gmra.mrb[0].mxu0 %v959
        %v1036 = vpop.f32.mrb[0].mxu0
        %v1037 = vadd.f32 0.0, %v1036
        %v1038 = vpop.f32.mrb[0].mxu0
        %v1039 = vadd.f32 0.0, %v1038
        %1040 = vmatprep.mubr.f32.mxu0 0.0
        %1041 = vmatmul.mubr.f32.gmra.mrb[0].mxu0 %v962
        %v1042 = vpop.f32.mrb[0].mxu0
        %v1043 = vadd.f32 0.0, %v1042
        %v1044 = vpop.f32.mrb[0].mxu0
        %v1045 = vadd.f32 0.0, %v1044
        %1046 = vmatprep.mubr.f32.mxu0 0.0
        %1047 = vmatmul.mubr.f32.gmra.mrb[0].mxu0 %v965
        %v1048 = vpop.f32.mrb[0].mxu0
        %v1049 = vadd.f32 0.0, %v1048
        %v1050 = vpop.f32.mrb[0].mxu0
        %v1051 = vadd.f32 0.0, %v1050
        %1052 = vmatprep.mubr.f32.mxu0 0.0
        %1053 = vmatmul.mubr.f32.gmra.mrb[0].mxu0 %v968
        %v1054 = vpop.f32.mrb[0].mxu0
        %v1055 = vadd.f32 0.0, %v1054
        %v1056 = vpop.f32.mrb[0].mxu0
        %v1057 = vadd.f32 0.0, %v1056
        %1058 = vdwg.mxu0
        %v1059 = vadd.f32 %v915, %v1037
        %v1060 = vadd.f32 %v916, %v1039
        %v1061 = vadd.f32 %v917, %v1043
        %v1062 = vadd.f32 %v918, %v1045
        %v1063 = vadd.f32 %v919, %v1049
        %v1064 = vadd.f32 %v920, %v1051
        %v1065 = vadd.f32 %v921, %v1055
        %v1066 = vadd.f32 %v922, %v1057
        %1067 = vrot.lane.b32.xlu0 %v227, 125
        %v1068 = vpop.permute.xlu0 %1067
        %1069 = vrot.lane.b32.xlu0 %v229, 125
        %v1070 = vpop.permute.xlu0 %1069
        %1071 = vrot.lane.b32.xlu0 %v228, 125
        %v1072 = vpop.permute.xlu0 %1071
        %1073 = vrot.lane.b32.xlu0 %v230, 125
        %v1074 = vpop.permute.xlu0 %1073
        %vm1075 = vcmp.lt.s32.totalorder %v240, 125
        %v1076 = vsel %vm1075, %v1068, %v1072
        %v1077 = vsel %vm1075, %v1070, %v1074
        %v1078 = vsel %vm1075, %v1072, %v1068
        %v1079 = vsel %vm1075, %v1074, %v1070
        %s1080 = scalar_lea.vmem %s2, 12
        %v1081 = vld [vmem:[%s1080] sm:$0x3]
        %v1083 = vlaneseq
        %v1084 = vshrl.u32 %v1083, 7
        %v1085 = vsub.s32 0, %v1084
        %v1086 = vrot.slane %v1081, %v1085
        %v1087 = vlaneseq
        %v1088 = vshrl.u32 %v1087, 7
        %v1089 = vsub.s32 1, %v1088
        %v1090 = vrot.slane %v1081, %v1089
        %v1093 = vmul.f32 %v1076, %v1086
        %v1094 = vmul.f32 %v1078, %v1090
        %v1095 = vmul.f32 %v1077, %v1086
        %v1096 = vmul.f32 %v1079, %v1090
        %s1097 = scalar_lea.vmem %s1, 192
        %v1098 = vld [vmem:[%s1097] sm:$0xff]
        %v1099 = vld [vmem:[%s1097 + $0x8] sm:$0xff]
        %v1100 = vld [vmem:[%s1097 + $0x10] sm:$0xff]
        %v1101 = vld [vmem:[%s1097 + $0x18] sm:$0xff]
        %v1103 = vsel %vm301, %v1098, 0
        %v1106 = vsel %vm301, %v1099, 0
        %v1109 = vsel %vm301, %v1100, 0
        %v1112 = vsel %vm301, %v1101, 0
        %1114 = vmatprep.subr.mxu0 %v1094
        %1115 = vmatpush1.msra.mxu0 %v1093
        %1116 = vmatprep.subr.mxu0 %v1096
        %1117 = vmatpush1.msra.mxu0 %v1095
        %1118 = vmatprep.subr.mxu0 0.0
        %1119 = vmatpush1.msra.mxu0 0.0
        %1120 = vmatprep.subr.mxu0 0.0
        %1121 = vmatpush1.msra.mxu0 0.0
        %1122 = vmatprep.subr.mxu0 0.0
        %1123 = vmatpush1.msra.mxu0 0.0
        %1124 = vmatprep.subr.mxu0 0.0
        %1125 = vmatpush1.msra.mxu0 0.0
        %1126 = vmatprep.subr.mxu0 0.0
        %1127 = vmatpush1.msra.mxu0 0.0
        %1128 = vmatprep.subr.mxu0 0.0
        %1129 = vmatpush1.msra.mxu0 0.0
        %1130 = vmatprep.subr.mxu0 0.0
        %1131 = vmatpush1.msra.mxu0 0.0
        %1132 = vmatprep.subr.mxu0 0.0
        %1133 = vmatpush1.msra.mxu0 0.0
        %1134 = vmatprep.subr.mxu0 0.0
        %1135 = vmatpush1.msra.mxu0 0.0
        %1136 = vmatprep.subr.mxu0 0.0
        %1137 = vmatpush1.msra.mxu0 0.0
        %1138 = vmatprep.subr.mxu0 0.0
        %1139 = vmatpush1.msra.mxu0 0.0
        %1140 = vmatprep.subr.mxu0 0.0
        %1141 = vmatpush1.msra.mxu0 0.0
        %1142 = vmatprep.subr.mxu0 0.0
        %1143 = vmatpush1.msra.mxu0 0.0
        %1144 = vmatprep.subr.mxu0 0.0
        %1145 = vmatpush1.msra.mxu0 0.0
        %1146 = vmatprep.subr.mxu0 0.0
        %1147 = vmatpush1.msra.mxu0 0.0
        %1148 = vmatprep.subr.mxu0 0.0
        %1149 = vmatpush1.msra.mxu0 0.0
        %1150 = vmatprep.subr.mxu0 0.0
        %1151 = vmatpush1.msra.mxu0 0.0
        %1152 = vmatprep.subr.mxu0 0.0
        %1153 = vmatpush1.msra.mxu0 0.0
        %1154 = vmatprep.subr.mxu0 0.0
        %1155 = vmatpush1.msra.mxu0 0.0
        %1156 = vmatprep.subr.mxu0 0.0
        %1157 = vmatpush1.msra.mxu0 0.0
        %1158 = vmatprep.subr.mxu0 0.0
        %1159 = vmatpush1.msra.mxu0 0.0
        %1160 = vmatprep.subr.mxu0 0.0
        %1161 = vmatpush1.msra.mxu0 0.0
        %1162 = vmatprep.subr.mxu0 0.0
        %1163 = vmatpush1.msra.mxu0 0.0
        %1164 = vmatprep.subr.mxu0 0.0
        %1165 = vmatpush1.msra.mxu0 0.0
        %1166 = vmatprep.subr.mxu0 0.0
        %1167 = vmatpush1.msra.mxu0 0.0
        %1168 = vmatprep.subr.mxu0 0.0
        %1169 = vmatpush1.msra.mxu0 0.0
        %1170 = vmatprep.subr.mxu0 0.0
        %1171 = vmatpush1.msra.mxu0 0.0
        %1172 = vmatprep.subr.mxu0 0.0
        %1173 = vmatpush1.msra.mxu0 0.0
        %1174 = vmatprep.subr.mxu0 0.0
        %1175 = vmatpush1.msra.mxu0 0.0
        %1176 = vmatprep.subr.mxu0 0.0
        %1177 = vmatpush1.msra.mxu0 0.0
        %1178 = vmatprep.mubr.f32.mxu0 0.0
        %1179 = vmatmul.mubr.f32.gmra.mrb[0].mxu0 %v1103
        %v1180 = vpop.f32.mrb[0].mxu0
        %v1181 = vadd.f32 0.0, %v1180
        %v1182 = vpop.f32.mrb[0].mxu0
        %v1183 = vadd.f32 0.0, %v1182
        %1184 = vmatprep.mubr.f32.mxu0 0.0
        %1185 = vmatmul.mubr.f32.gmra.mrb[0].mxu0 %v1106
        %v1186 = vpop.f32.mrb[0].mxu0
        %v1187 = vadd.f32 0.0, %v1186
        %v1188 = vpop.f32.mrb[0].mxu0
        %v1189 = vadd.f32 0.0, %v1188
        %1190 = vmatprep.mubr.f32.mxu0 0.0
        %1191 = vmatmul.mubr.f32.gmra.mrb[0].mxu0 %v1109
        %v1192 = vpop.f32.mrb[0].mxu0
        %v1193 = vadd.f32 0.0, %v1192
        %v1194 = vpop.f32.mrb[0].mxu0
        %v1195 = vadd.f32 0.0, %v1194
        %1196 = vmatprep.mubr.f32.mxu0 0.0
        %1197 = vmatmul.mubr.f32.gmra.mrb[0].mxu0 %v1112
        %v1198 = vpop.f32.mrb[0].mxu0
        %v1199 = vadd.f32 0.0, %v1198
        %v1200 = vpop.f32.mrb[0].mxu0
        %v1201 = vadd.f32 0.0, %v1200
        %1202 = vdwg.mxu0
        %v1203 = vadd.f32 %v1059, %v1181
        %v1204 = vadd.f32 %v1060, %v1183
        %v1205 = vadd.f32 %v1061, %v1187
        %v1206 = vadd.f32 %v1062, %v1189
        %v1207 = vadd.f32 %v1063, %v1193
        %v1208 = vadd.f32 %v1064, %v1195
        %v1209 = vadd.f32 %v1065, %v1199
        %v1210 = vadd.f32 %v1066, %v1201
        %v1211 = vld [vmem:[%s3] sm:$0xff]
        %v1212 = vld [vmem:[%s3 + $0x8] sm:$0xff]
        %v1213 = vld [vmem:[%s3 + $0x10] sm:$0xff]
        %v1214 = vld [vmem:[%s3 + $0x18] sm:$0xff]
        %1216 = vset.pattern.permute.xlu0 0
        %1217 = vperm.xlu0 %1216, %v1211
        %v1218 = vpop.permute.xlu0 %1217
        %1221 = vset.pattern.permute.xlu0 0
        %1222 = vperm.xlu0 %1221, %v1212
        %v1223 = vpop.permute.xlu0 %1222
        %1226 = vset.pattern.permute.xlu0 0
        %1227 = vperm.xlu0 %1226, %v1213
        %v1228 = vpop.permute.xlu0 %1227
        %1231 = vset.pattern.permute.xlu0 0
        %1232 = vperm.xlu0 %1231, %v1214
        %v1233 = vpop.permute.xlu0 %1232
        %v1235 = vadd.f32 %v1203, %v1218
        %v1236 = vadd.f32 %v1204, %v1218
        %v1237 = vadd.f32 %v1205, %v1223
        %v1238 = vadd.f32 %v1206, %v1223
        %v1239 = vadd.f32 %v1207, %v1228
        %v1240 = vadd.f32 %v1208, %v1228
        %v1241 = vadd.f32 %v1209, %v1233
        %v1242 = vadd.f32 %v1210, %v1233
        %1243 = vst [vmem:[%s215] sm:$0xff] %v1235
        %1244 = vst [vmem:[%s215 + $0x8] sm:$0xff] %v1236
        %1245 = vst [vmem:[%s215 + $0x10] sm:$0xff] %v1237
        %1246 = vst [vmem:[%s215 + $0x18] sm:$0xff] %v1238
        %1247 = vst [vmem:[%s215 + $0x20] sm:$0xff] %v1239
        %1248 = vst [vmem:[%s215 + $0x28] sm:$0xff] %v1240
        %1249 = vst [vmem:[%s215 + $0x30] sm:$0xff] %v1241
        %1250 = vst [vmem:[%s215 + $0x38] sm:$0xff] %v1242
        %s1251 = sand.u32 %s131, 1
        %s1252 = scalar_lea.sflag [#allocation3], %s1251
        %s1253 = sand.u32 %s131, 1
        %s1254 = smul.addr %s1253, 64
        %s1255 = scalar_lea.vmem [#allocation2], %s1254
        // Predicated region
        $region37: #{tpu_custom_call.1} parent=35 // pred_check
          %p1256 = pneg %p141
        $region38: #{tpu_custom_call.1} parent=35 // pred_check_branch
          %1258 = sbr.rel (%p1256) target = $region40
        $region39: #{tpu_custom_call.1} parent=35 // pred_region
          %s1259 = smul.u32 2, %s23
          %s1261 = ssub.s32 1024, 1024
          %1262 = vsyncadd %s1252, %s1261
          %s1263 = smul.addr %s22, 8
          %s1264 = sadd.s32 %s1259, %s1263
          %s1265 = smul.addr %s1264, 128
          %s1266 = scalar_lea.hbm %s4, %s1265
          %s1267 = sshll.u32 %s1255, 4
          %s1268 = int_to_ptr.vmem [resolvable:$true] %s1267
          %1273 = dma.vmem_to_hbm [thread:$0]  %s1268, 1024, %s1266, %s1252, 256, 256, 16
        $region40: #{tpu_custom_call.1} parent=35 // pred_fallthru
          _
      $region36: #{tpu_custom_call.1} parent=5 // pred_fallthru
        _
      %p1274 = scmp.le.s32.totalorder 2, %s13
      // Predicated region
      $region41: #{tpu_custom_call.1} parent=5 // pred_check
        %p1275 = pneg %p1274
      $region42: #{tpu_custom_call.1} parent=5 // pred_check_branch
        %1277 = sbr.rel (%p1275) target = $region44
      $region43: #{tpu_custom_call.1} parent=5 // pred_region
        %s1278 = ssub.s32 %s13, 2
        // Predicated region
        $region45: #{tpu_custom_call.1} parent=43 // pred_check
          %p1279 = pneg %p147
        $region46: #{tpu_custom_call.1} parent=43 // pred_check_branch
          %1281 = sbr.rel (%p1279) target = $region48
        $region47: #{tpu_custom_call.1} parent=43 // pred_region
          %s1282 = sand.u32 %s132, 1
          %s1283 = scalar_lea.sflag [#allocation3], %s1282
          %s1284 = sand.u32 %s132, 1
          %s1285 = smul.addr %s1284, 64
          %s1286 = scalar_lea.vmem [#allocation2], %s1285
          %1287 = dma.done %s1283, 1024
        $region48: #{tpu_custom_call.1} parent=43 // pred_fallthru
          _
      $region44: #{tpu_custom_call.1} parent=5 // pred_fallthru
        _
    $region6: #{tpu_custom_call.1} parent=1 // loop_footer
      %s17 = sadd.s32 1, %s13
    $region7: #{tpu_custom_call.1} parent=1 // loop_footer_branch
      %12 = sbr.rel target = $region3
    $region8: #{tpu_custom_call.1} parent=1 // loop_exit
      _
    %1288 = vsyncpa [#allocation3], 1
    %s1289 = scalar_lea.sflag [#allocation3], 1
    %1290 = vsyncpa %s1289, 1

</llo_original>
